<compile_context>
chip_gen: v6e
topology: v6e:2x2x1
jax: 0.10.0
libtpu: 0.0.40
codegen_flags: <defaults>
</compile_context>

<pallas_src>
import functools

import jax
import jax.numpy as jnp
from jax.experimental import pallas as pl
from jax.experimental.pallas import tpu as pltpu


def _conv_kernel(xtap_ref, w_ref, o_ref, patches_ref, *,
                 kh_size, kw_size, stride, ho, wo, cin):
    """One batch element per grid step.

    xtap_ref   : [1, T, Cin, Hpad*Wo]   polyphase / column-shifted input taps
    w_ref      : [Cout, KH*KW*Cin]      weight in im2col (kh, kw, ci) ordering
    o_ref      : [1, Cout, Ho*Wo]       lane-dense output slab
    patches_ref: [KH*KW*Cin, Ho*Wo]     VMEM scratch (im2col patch matrix)
    """
    m = ho * wo
    dw_count = (kw_size - 1) // stride + 1
    xt = xtap_ref[...]          # [1, T, Cin, Hpad*Wo]

    # Assemble the im2col patch matrix.  Each tap is a contiguous lane slice of
    # a pre-flattened polyphase plane (the stride-2 decimation was done once in
    # the wrapper), so this is just KH*KW plain copies into scratch.
    for kh in range(kh_size):
        dh = kh // stride
        ph = kh % stride
        for kw in range(kw_size):
            dw = kw // stride
            pw = kw % stride
            t = (ph * stride + pw) * dw_count + dw      # tap plane index
            g = kh * kw_size + kw                       # row group in patches
            patches_ref[g * cin:(g + 1) * cin, :] = (
                xt[0, t, :, dh * wo: dh * wo + m].astype(patches_ref.dtype))

    # One fused MXU contraction: [Cout, K*Cin] @ [K*Cin, Ho*Wo] -> [Cout, Ho*Wo]
    # (f32 accumulate; bf16 inputs would be an option on v6e+ if tolerance allows).
    out = jnp.dot(w_ref[...], patches_ref[...],
                  preferred_element_type=jnp.float32)
    o_ref[...] = out[None].astype(o_ref.dtype)


def conv2d_pallas(x_nchw, weight_oihw, *, stride, padding=1):
    """Matches torch.nn.functional.conv2d(x, weight, padding=padding, stride=stride)."""
    n, cin, h, w = x_nchw.shape
    cout, cin_w, kh, kw = weight_oihw.shape
    assert cin == cin_w

    ho = (h + 2 * padding - kh) // stride + 1
    wo = (w + 2 * padding - kw) // stride + 1
    hpad = ho + (kh - 1) // stride            # rows per polyphase plane (incl. halo)
    dw_count = (kw - 1) // stride + 1         # column-shift variants per phase
    need_w = wo + dw_count - 1

    # ---- wrapper-side layout plumbing (pad + polyphase split + flatten) ----
    xp = jnp.pad(x_nchw,
                 ((0, 0), (0, 0), (padding, padding), (padding, padding)))
    taps = []
    for ph in range(stride):
        for pw in range(stride):
            phase = xp[:, :, ph::stride, pw::stride]
            pad_h = max(0, hpad - phase.shape[2])
            pad_w = max(0, need_w - phase.shape[3])
            if pad_h or pad_w:
                phase = jnp.pad(phase,
                                ((0, 0), (0, 0), (0, pad_h), (0, pad_w)))
            phase = phase[:, :, :hpad, :need_w]
            for dw in range(dw_count):
                win = phase[:, :, :, dw:dw + wo]           # [N, Cin, Hpad, Wo]
                taps.append(win.reshape(n, cin, hpad * wo))
    xtap = jnp.stack(taps, axis=1)            # [N, T, Cin, Hpad*Wo]
    t_count = xtap.shape[1]

    # Weight -> [Cout, KH*KW*Cin] with (kh, kw, ci) column ordering.
    w2 = jnp.transpose(weight_oihw, (0, 2, 3, 1)).reshape(cout, kh * kw * cin)

    kernel = functools.partial(_conv_kernel, kh_size=kh, kw_size=kw,
                               stride=stride, ho=ho, wo=wo, cin=cin)

    out3 = pl.pallas_call(
        kernel,
        out_shape=jax.ShapeDtypeStruct((n, cout, ho * wo), x_nchw.dtype),
        grid_spec=pltpu.PrefetchScalarGridSpec(
            num_scalar_prefetch=0,
            grid=(n,),
            in_specs=[
                pl.BlockSpec((1, t_count, cin, hpad * wo),
                             lambda b: (b, 0, 0, 0)),
                pl.BlockSpec((cout, kh * kw * cin), lambda b: (0, 0)),
            ],
            out_specs=pl.BlockSpec((1, cout, ho * wo), lambda b: (b, 0, 0)),
            scratch_shapes=[pltpu.VMEM((kh * kw * cin, ho * wo), jnp.float32)],
        ),
        compiler_params=pltpu.CompilerParams(
            dimension_semantics=("parallel",),
            vmem_limit_bytes=32 * 1024 * 1024,
        ),
    )(xtap, w2)

    return out3.reshape(n, cout, ho, wo)      # already NCHW


if __name__ == "__main__":
    key = jax.random.PRNGKey(0)

    # Module __init__: weight = ones([3, 3, 3, 3])  (Cout=3, Cin=3, 3x3 kernel)
    weight = jnp.ones((3, 3, 3, 3), dtype=jnp.float32)
    stride = 2

    # Small NCHW input consistent with the 3-input-channel weight.
    x = jax.random.normal(key, (2, 3, 16, 16), dtype=jnp.float32)

    out = conv2d_pallas(x, weight, stride=stride, padding=1)
    out = jax.block_until_ready(out)

    # Reference check against XLA's conv (same semantics as F.conv2d).
    ref = jax.lax.conv_general_dilated(
        x, weight,
        window_strides=(stride, stride),
        padding=((1, 1), (1, 1)),
        dimension_numbers=("NCHW", "OIHW", "NCHW"),
    )
    assert out.shape == ref.shape == (2, 3, 8, 8), out.shape
    assert jnp.allclose(out, ref, atol=1e-4, rtol=1e-4), float(
        jnp.max(jnp.abs(out - ref)))

    print("KERNEL_OK")
</pallas_src>

<mosaic_0001>
module attributes {stable_mosaic.version = 11 : i64} {
  func.func @_conv_kernel(%arg0: i32, %arg1: memref<1x8x3x72xf32, #tpu.memory_space<vmem>>, %arg2: memref<3x27xf32, #tpu.memory_space<vmem>>, %arg3: memref<1x3x64xf32, #tpu.memory_space<vmem>>, %arg4: memref<27x64xf32, #tpu.memory_space<vmem>>) attributes {dimension_semantics = [#tpu.dimension_semantics<parallel>], iteration_bounds = array<i64: 2>, scalar_prefetch = 0 : i64, scratch_operands = 1 : i64, tpu.core_type = #tpu.core_type<tc>, window_params = [{transform_indices = @transform_0, window_bounds = array<i64: 1, 8, 3, 72>}, {pipeline_mode = #tpu.pipeline_mode<synchronous>, transform_indices = @transform_1, window_bounds = array<i64: 3, 27>}, {transform_indices = @transform_2, window_bounds = array<i64: 1, 3, 64>}]} {
    %c0 = arith.constant 0 : index
    %c0_0 = arith.constant 0 : index
    %c0_1 = arith.constant 0 : index
    %c0_2 = arith.constant 0 : index
    %0 = vector.load %arg1[%c0, %c0_0, %c0_1, %c0_2] : memref<1x8x3x72xf32, #tpu.memory_space<vmem>>, vector<1x8x3x72xf32>
    %1 = vector.extract_strided_slice %0 {offsets = [0, 0, 0, 0], sizes = [1, 1, 3, 64], strides = [1, 1, 1, 1]} : vector<1x8x3x72xf32> to vector<1x1x3x64xf32>
    %2 = vector.shape_cast %1 : vector<1x1x3x64xf32> to vector<3x64xf32>
    %c0_3 = arith.constant 0 : index
    %c0_4 = arith.constant 0 : index
    %3 = vector.load %arg4[%c0_3, %c0_4] : memref<27x64xf32, #tpu.memory_space<vmem>>, vector<3x64xf32>
    tpu.vector_store %arg4[%c0_3, %c0_4], %2 {strides = array<i32>} : memref<27x64xf32, #tpu.memory_space<vmem>>, vector<3x64xf32>,
    %4 = vector.extract_strided_slice %0 {offsets = [0, 2, 0, 0], sizes = [1, 1, 3, 64], strides = [1, 1, 1, 1]} : vector<1x8x3x72xf32> to vector<1x1x3x64xf32>
    %5 = vector.shape_cast %4 : vector<1x1x3x64xf32> to vector<3x64xf32>
    %c3 = arith.constant 3 : index
    %c0_5 = arith.constant 0 : index
    %6 = vector.load %arg4[%c3, %c0_5] : memref<27x64xf32, #tpu.memory_space<vmem>>, vector<3x64xf32>
    tpu.vector_store %arg4[%c3, %c0_5], %5 {strides = array<i32>} : memref<27x64xf32, #tpu.memory_space<vmem>>, vector<3x64xf32>,
    %7 = vector.extract_strided_slice %0 {offsets = [0, 1, 0, 0], sizes = [1, 1, 3, 64], strides = [1, 1, 1, 1]} : vector<1x8x3x72xf32> to vector<1x1x3x64xf32>
    %8 = vector.shape_cast %7 : vector<1x1x3x64xf32> to vector<3x64xf32>
    %c6 = arith.constant 6 : index
    %c0_6 = arith.constant 0 : index
    %9 = vector.load %arg4[%c6, %c0_6] : memref<27x64xf32, #tpu.memory_space<vmem>>, vector<3x64xf32>
    tpu.vector_store %arg4[%c6, %c0_6], %8 {strides = array<i32>} : memref<27x64xf32, #tpu.memory_space<vmem>>, vector<3x64xf32>,
    %10 = vector.extract_strided_slice %0 {offsets = [0, 4, 0, 0], sizes = [1, 1, 3, 64], strides = [1, 1, 1, 1]} : vector<1x8x3x72xf32> to vector<1x1x3x64xf32>
    %11 = vector.shape_cast %10 : vector<1x1x3x64xf32> to vector<3x64xf32>
    %c9 = arith.constant 9 : index
    %c0_7 = arith.constant 0 : index
    %12 = vector.load %arg4[%c9, %c0_7] : memref<27x64xf32, #tpu.memory_space<vmem>>, vector<3x64xf32>
    tpu.vector_store %arg4[%c9, %c0_7], %11 {strides = array<i32>} : memref<27x64xf32, #tpu.memory_space<vmem>>, vector<3x64xf32>,
    %13 = vector.extract_strided_slice %0 {offsets = [0, 6, 0, 0], sizes = [1, 1, 3, 64], strides = [1, 1, 1, 1]} : vector<1x8x3x72xf32> to vector<1x1x3x64xf32>
    %14 = vector.shape_cast %13 : vector<1x1x3x64xf32> to vector<3x64xf32>
    %c12 = arith.constant 12 : index
    %c0_8 = arith.constant 0 : index
    %15 = vector.load %arg4[%c12, %c0_8] : memref<27x64xf32, #tpu.memory_space<vmem>>, vector<3x64xf32>
    tpu.vector_store %arg4[%c12, %c0_8], %14 {strides = array<i32>} : memref<27x64xf32, #tpu.memory_space<vmem>>, vector<3x64xf32>,
    %16 = vector.extract_strided_slice %0 {offsets = [0, 5, 0, 0], sizes = [1, 1, 3, 64], strides = [1, 1, 1, 1]} : vector<1x8x3x72xf32> to vector<1x1x3x64xf32>
    %17 = vector.shape_cast %16 : vector<1x1x3x64xf32> to vector<3x64xf32>
    %c15 = arith.constant 15 : index
    %c0_9 = arith.constant 0 : index
    %18 = vector.load %arg4[%c15, %c0_9] : memref<27x64xf32, #tpu.memory_space<vmem>>, vector<3x64xf32>
    tpu.vector_store %arg4[%c15, %c0_9], %17 {strides = array<i32>} : memref<27x64xf32, #tpu.memory_space<vmem>>, vector<3x64xf32>,
    %19 = vector.extract_strided_slice %0 {offsets = [0, 0, 0, 8], sizes = [1, 1, 3, 64], strides = [1, 1, 1, 1]} : vector<1x8x3x72xf32> to vector<1x1x3x64xf32>
    %20 = vector.shape_cast %19 : vector<1x1x3x64xf32> to vector<3x64xf32>
    %c18 = arith.constant 18 : index
    %c0_10 = arith.constant 0 : index
    %21 = vector.load %arg4[%c18, %c0_10] : memref<27x64xf32, #tpu.memory_space<vmem>>, vector<3x64xf32>
    tpu.vector_store %arg4[%c18, %c0_10], %20 {strides = array<i32>} : memref<27x64xf32, #tpu.memory_space<vmem>>, vector<3x64xf32>,
    %22 = vector.extract_strided_slice %0 {offsets = [0, 2, 0, 8], sizes = [1, 1, 3, 64], strides = [1, 1, 1, 1]} : vector<1x8x3x72xf32> to vector<1x1x3x64xf32>
    %23 = vector.shape_cast %22 : vector<1x1x3x64xf32> to vector<3x64xf32>
    %c21 = arith.constant 21 : index
    %c0_11 = arith.constant 0 : index
    %24 = vector.load %arg4[%c21, %c0_11] : memref<27x64xf32, #tpu.memory_space<vmem>>, vector<3x64xf32>
    tpu.vector_store %arg4[%c21, %c0_11], %23 {strides = array<i32>} : memref<27x64xf32, #tpu.memory_space<vmem>>, vector<3x64xf32>,
    %25 = vector.extract_strided_slice %0 {offsets = [0, 1, 0, 8], sizes = [1, 1, 3, 64], strides = [1, 1, 1, 1]} : vector<1x8x3x72xf32> to vector<1x1x3x64xf32>
    %26 = vector.shape_cast %25 : vector<1x1x3x64xf32> to vector<3x64xf32>
    %c24 = arith.constant 24 : index
    %c0_12 = arith.constant 0 : index
    %27 = vector.load %arg4[%c24, %c0_12] : memref<27x64xf32, #tpu.memory_space<vmem>>, vector<3x64xf32>
    tpu.vector_store %arg4[%c24, %c0_12], %26 {strides = array<i32>} : memref<27x64xf32, #tpu.memory_space<vmem>>, vector<3x64xf32>,
    %c0_13 = arith.constant 0 : index
    %c0_14 = arith.constant 0 : index
    %28 = vector.load %arg2[%c0_13, %c0_14] : memref<3x27xf32, #tpu.memory_space<vmem>>, vector<3x27xf32>
    %c0_15 = arith.constant 0 : index
    %c0_16 = arith.constant 0 : index
    %29 = vector.load %arg4[%c0_15, %c0_16] : memref<27x64xf32, #tpu.memory_space<vmem>>, vector<27x64xf32>
    %cst = arith.constant dense<0.000000e+00> : vector<3x64xf32>
    %30 = tpu.matmul %28, %29, %cst {dimension_numbers = #tpu.dot_dimension_numbers<[1], [0], [0], [1], [0, 0, 1, 1], [], []>} : vector<3x27xf32>, vector<27x64xf32>, vector<3x64xf32> -> vector<3x64xf32>
    %31 = vector.shape_cast %30 : vector<3x64xf32> to vector<1x3x64xf32>
    %c0_17 = arith.constant 0 : index
    %c0_18 = arith.constant 0 : index
    %c0_19 = arith.constant 0 : index
    %32 = vector.load %arg3[%c0_17, %c0_18, %c0_19] : memref<1x3x64xf32, #tpu.memory_space<vmem>>, vector<1x3x64xf32>
    tpu.vector_store %arg3[%c0_17, %c0_18, %c0_19], %31 {strides = array<i32>} : memref<1x3x64xf32, #tpu.memory_space<vmem>>, vector<1x3x64xf32>,
    return
  }
  func.func @transform_0(%arg0: i32) -> (i32, i32, i32, i32) {
    %c0_i32 = arith.constant 0 : i32
    %c0_i32_0 = arith.constant 0 : i32
    %c0_i32_1 = arith.constant 0 : i32
    %c0_i32_2 = arith.constant 0 : i32
    return %arg0, %c0_i32, %c0_i32_0, %c0_i32_1 : i32, i32, i32, i32
  }
  func.func @transform_1(%arg0: i32) -> (i32, i32) {
    %c0_i32 = arith.constant 0 : i32
    %c0_i32_0 = arith.constant 0 : i32
    %c0_i32_1 = arith.constant 0 : i32
    return %c0_i32, %c0_i32_0 : i32, i32
  }
  func.func @transform_2(%arg0: i32) -> (i32, i32, i32) {
    %c0_i32 = arith.constant 0 : i32
    %c0_i32_0 = arith.constant 0 : i32
    %c0_i32_1 = arith.constant 0 : i32
    return %arg0, %c0_i32, %c0_i32_0 : i32, i32, i32
  }
}

</mosaic_0001>

<llo_original>
// kernel: tpu_custom_call.1
$region0: #{tpu_custom_call.1}
  #allocation0 [shape = 'u32[]', space=smem, size = 0x4, offset = 0x4, fixed_abs, tag = 'smem constant byte address 0x4 - core index']
  #allocation1 [shape = 'u32[144,128]{1,0:T(1,128)}', space=vmem, size = 0x12000, scoped, tag = 'internal scratch']
  #allocation2 [shape = 'f32[27,64]{1,0:T(8,128)}', space=vmem, size = 0x4000, scoped, tag = 'scratch operand']
  %s0 = inlined_call_operand.vmem [shape: f32[2,8,3,72], index: 0, kind: input, shape index: {}]
  %s1 = inlined_call_operand.vmem [shape: f32[3,27], index: 1, kind: input, shape index: {}]
  %s2 = inlined_call_operand.vmem [shape: f32[2,3,64], index: 2, kind: output, shape index: {}]
  %s3 = sld [smem:[#allocation0]]
  $region41: #{tpu_custom_call.1} parent=0
    _
  %s5 = ssub.s32 1, %s3
  %s6 = scalar_select 0, %s5, %s3
  loop: start=0, step=1, limit=4
  $region2: #{tpu_custom_call.1} parent=0 // loop_pre_header
    _
  $region3: #{tpu_custom_call.1} parent=0 // loop_header
    %s8 = sphi 0, %s12
    %p9 = scmp.ge.s32.totalorder %s8, 4
    %s18 = sphi 0, %s20
    %s21 = sphi 0, %s18
    %s22 = sphi 0, %s21
    %s38 = sphi 0, %s22
    %s42 = sphi 0, %s42
    %s44 = sphi 0, %s42
    %s45 = sphi 0, %s44
    %s59 = sphi 0, %s45
    %s65 = sphi 0, %s67
    %s68 = sphi 0, %s65
    %s69 = sphi 0, %s68
    %s85 = sphi 0, %s69
  $region4: #{tpu_custom_call.1} parent=0 // loop_header_branch
    %11 = sbr.rel (%p9) target = $region8
  $region5: #{tpu_custom_call.1} parent=0 // loop_body
    %s13 = ssub.s32 %s8, 1
    %s14 = ssub.s32 %s8, 2
    %s15 = sadd.s32 %s8, 1
    %s16 = ssub.s32 %s8, %s15
    %p17 = scmp.eq.s32.totalorder %s16, 0
    %s19 = sadd.s32 %s18, 1
    %s20 = scalar_select %p17, %s18, %s19
    %p23 = pneg %p17
    %p24 = scmp.eq.s32.totalorder %s8, 1
    %p25 = por %p23, %p24
    %p26 = scmp.ne.s32.totalorder %s18, %s21
    %p27 = scmp.eq.s32.totalorder %s8, 0
    %p28 = por %p26, %p27
    %p29 = scmp.ne.s32.totalorder %s18, %s21
    %p30 = scmp.eq.s32.totalorder %s13, 1
    %p31 = por %p29, %p30
    %p32 = scmp.ne.s32.totalorder %s21, %s22
    %p33 = scmp.eq.s32.totalorder %s13, 0
    %p34 = por %p32, %p33
    %p35 = scmp.ne.s32.totalorder %s21, %s22
    %p36 = scmp.eq.s32.totalorder %s14, 1
    %p37 = por %p35, %p36
    %p39 = scmp.ne.s32.totalorder %s22, %s38
    %p40 = scmp.eq.s32.totalorder %s14, 0
    %p41 = por %p39, %p40
    %s43 = sadd.s32 %s42, 1
    %p46 = scmp.eq.s32.totalorder %s8, 1
    %p47 = scmp.ne.s32.totalorder %s42, %s44
    %p48 = scmp.eq.s32.totalorder %s8, 0
    %p49 = por %p47, %p48
    %p50 = scmp.ne.s32.totalorder %s42, %s44
    %p51 = scmp.eq.s32.totalorder %s13, 1
    %p52 = por %p50, %p51
    %p53 = scmp.ne.s32.totalorder %s44, %s45
    %p54 = scmp.eq.s32.totalorder %s13, 0
    %p55 = por %p53, %p54
    %p56 = scmp.ne.s32.totalorder %s44, %s45
    %p57 = scmp.eq.s32.totalorder %s14, 1
    %p58 = por %p56, %p57
    %p60 = scmp.ne.s32.totalorder %s45, %s59
    %p61 = scmp.eq.s32.totalorder %s14, 0
    %p62 = por %p60, %p61
    %s63 = ssub.s32 %s8, %s15
    %p64 = scmp.eq.s32.totalorder %s63, 0
    %s66 = sadd.s32 %s65, 1
    %s67 = scalar_select %p64, %s65, %s66
    %p70 = pneg %p64
    %p71 = scmp.eq.s32.totalorder %s8, 1
    %p72 = por %p70, %p71
    %p73 = scmp.ne.s32.totalorder %s65, %s68
    %p74 = scmp.eq.s32.totalorder %s8, 0
    %p75 = por %p73, %p74
    %p76 = scmp.ne.s32.totalorder %s65, %s68
    %p77 = scmp.eq.s32.totalorder %s13, 1
    %p78 = por %p76, %p77
    %p79 = scmp.ne.s32.totalorder %s68, %s69
    %p80 = scmp.eq.s32.totalorder %s13, 0
    %p81 = por %p79, %p80
    %p82 = scmp.ne.s32.totalorder %s68, %s69
    %p83 = scmp.eq.s32.totalorder %s14, 1
    %p84 = por %p82, %p83
    %p86 = scmp.ne.s32.totalorder %s69, %s85
    %p87 = scmp.eq.s32.totalorder %s14, 0
    %p88 = por %p86, %p87
    %p89 = scmp.le.s32.totalorder 1, %s8
    %p90 = scmp.lt.s32.totalorder %s8, 3
    %p91 = pnand %p89, %p90
    %p92 = pneg %p91
    // Predicated region
    $region9: #{tpu_custom_call.1} parent=5 // pred_check
      _
    $region10: #{tpu_custom_call.1} parent=5 // pred_check_branch
      %94 = sbr.rel (%p91) target = $region12
    $region11: #{tpu_custom_call.1} parent=5 // pred_region
      %s95 = ssub.s32 %s8, 1
      // Predicated region
      $region13: #{tpu_custom_call.1} parent=11 // pred_check
        %p96 = pneg %p55
      $region14: #{tpu_custom_call.1} parent=11 // pred_check_branch
        %98 = sbr.rel (%p96) target = $region16
      $region15: #{tpu_custom_call.1} parent=11 // pred_region
        _
      $region16: #{tpu_custom_call.1} parent=11 // pred_fallthru
        _
    $region12: #{tpu_custom_call.1} parent=5 // pred_fallthru
      _
    %p99 = scmp.lt.s32.totalorder %s8, 2
    // Predicated region
    $region17: #{tpu_custom_call.1} parent=5 // pred_check
      %p100 = pneg %p99
    $region18: #{tpu_custom_call.1} parent=5 // pred_check_branch
      %102 = sbr.rel (%p100) target = $region20
    $region19: #{tpu_custom_call.1} parent=5 // pred_region
      // Predicated region
      $region21: #{tpu_custom_call.1} parent=19 // pred_check
        %p103 = pneg %p28
      $region22: #{tpu_custom_call.1} parent=19 // pred_check_branch
        %105 = sbr.rel (%p103) target = $region24
      $region23: #{tpu_custom_call.1} parent=19 // pred_region
        %p106 = scmp.lt.s32.totalorder %s8, 1
        %s107 = scalar_select %p106, %s8, 1
        %s108 = smul.addr %s107, 8
        %s109 = smul.addr %s108, 4
        %s110 = scalar_lea.vmem %s0, %s109
      $region24: #{tpu_custom_call.1} parent=19 // pred_fallthru
        _
    $region20: #{tpu_custom_call.1} parent=5 // pred_fallthru
      _
    %p111 = scmp.le.s32.totalorder 1, %s8
    %p112 = scmp.lt.s32.totalorder %s8, 3
    %p113 = pnand %p111, %p112
    %p114 = pneg %p113
    // Predicated region
    $region25: #{tpu_custom_call.1} parent=5 // pred_check
      _
    $region26: #{tpu_custom_call.1} parent=5 // pred_check_branch
      %116 = sbr.rel (%p113) target = $region28
    $region27: #{tpu_custom_call.1} parent=5 // pred_region
      %s117 = ssub.s32 %s8, 1
      %p118 = scmp.lt.s32.totalorder %s13, 1
      %s119 = scalar_select %p118, %s13, 1
      %s120 = smul.addr %s119, 8
      %s121 = smul.addr %s120, 4
      %s122 = scalar_lea.vmem %s0, %s121
      %p123 = pneg %p34
      %p124 = pneg %p31
      %p125 = pneg %p55
      %p126 = pneg %p52
      %p127 = pneg %p81
      %p128 = pneg %p78
      %p129 = scmp.lt.s32.totalorder %s13, 1
      %s130 = scalar_select %p129, %s13, 1
      %s131 = smul.addr %s130, 4
      %s132 = scalar_lea.vmem %s2, %s131
      %p133 = scmp.lt.s32.totalorder %s13, 1
      %s134 = scalar_select %p133, %s13, 1
      %s135 = smul.addr %s134, 8
      %s136 = smul.addr %s135, 4
      %s137 = scalar_lea.vmem %s0, %s136
      %p138 = scmp.lt.s32.totalorder %s13, 1
      %s139 = scalar_select %p138, %s13, 1
      %s140 = smul.addr %s139, 4
      %s141 = scalar_lea.vmem %s2, %s140
      %v142 = vld [vmem:[%s137] sm:$0x7]
      %v143 = vld [vmem:[%s137 + $0x4] sm:$0x7]
      %v144 = vld [vmem:[%s137 + $0x8] sm:$0x7]
      %v145 = vld [vmem:[%s137 + $0x10] sm:$0x7]
      %v146 = vld [vmem:[%s137 + $0x14] sm:$0x7]
      %v147 = vld [vmem:[%s137 + $0x18] sm:$0x7]
      %vm148 = vcmask 518144
      %149 = vst.msk [vmem:[#allocation2] sm:$0x7] %vm148, %v142
      %150 = vst.msk [vmem:[#allocation2 + $0x3] sm:$0x7] %vm148, %v144
      %151 = vst.msk [vmem:[#allocation2 + $0x6] sm:$0x7] %vm148, %v143
      %152 = vst.msk [vmem:[#allocation2 + $0x9] sm:$0x7] %vm148, %v145
      %153 = vst.msk [vmem:[#allocation2 + $0xc] sm:$0x7] %vm148, %v147
      %154 = vst.msk [vmem:[#allocation2 + $0xf] sm:$0x7] %vm148, %v146
      %156 = vrot.lane.b32.xlu0 %v142, 120
      %v157 = vpop.permute.xlu0 %156
      %159 = vst.msk [vmem:[#allocation2 + $0x12] sm:$0x7] %vm148, %v157
      %161 = vrot.lane.b32.xlu0 %v144, 120
      %v162 = vpop.permute.xlu0 %161
      %164 = vst.msk [vmem:[#allocation2 + $0x15] sm:$0x7] %vm148, %v162
      %166 = vrot.lane.b32.xlu0 %v143, 120
      %v167 = vpop.permute.xlu0 %166
      %169 = vst.msk [vmem:[#allocation2 + $0x18] sm:$0x7] %vm148, %v167
      %v170 = vld [vmem:[%s1] sm:$0x7]
      %v171 = vld [vmem:[#allocation2] sm:$0xff]
      %v172 = vld [vmem:[#allocation2 + $0x8] sm:$0xff]
      %v173 = vld [vmem:[#allocation2 + $0x10] sm:$0xff]
      %v174 = vld [vmem:[#allocation2 + $0x18] sm:$0x7]
      %vm175 = vcmask 220160
      %v177 = vsel %vm175, %v170, 0
      %vm179 = vcmask 1042432
      %v181 = vsel %vm179, %v174, 0
      %183 = vmatprep.subr.mxu0 0.0
      %184 = vmatpush1.msra.mxu0 0.0
      %185 = vmatprep.subr.mxu0 0.0
      %186 = vmatpush1.msra.mxu0 0.0
      %187 = vmatprep.subr.mxu0 0.0
      %188 = vmatpush1.msra.mxu0 0.0
      %189 = vmatprep.subr.mxu0 0.0
      %190 = vmatpush1.msra.mxu0 0.0
      %191 = vmatprep.subr.mxu0 0.0
      %192 = vmatpush1.msra.mxu0 0.0
      %193 = vmatprep.subr.mxu0 0.0
      %194 = vmatpush1.msra.mxu0 0.0
      %195 = vmatprep.subr.mxu0 0.0
      %196 = vmatpush1.msra.mxu0 0.0
      %197 = vmatprep.subr.mxu0 0.0
      %198 = vmatpush1.msra.mxu0 0.0
      %199 = vmatprep.subr.mxu0 0.0
      %200 = vmatpush1.msra.mxu0 0.0
      %201 = vmatprep.subr.mxu0 0.0
      %202 = vmatpush1.msra.mxu0 0.0
      %203 = vmatprep.subr.mxu0 0.0
      %204 = vmatpush1.msra.mxu0 0.0
      %205 = vmatprep.subr.mxu0 0.0
      %206 = vmatpush1.msra.mxu0 0.0
      %207 = vmatprep.subr.mxu0 0.0
      %208 = vmatpush1.msra.mxu0 %v181
      %209 = vmatprep.subr.mxu0 0.0
      %210 = vmatpush1.msra.mxu0 %v173
      %211 = vmatprep.subr.mxu0 0.0
      %212 = vmatpush1.msra.mxu0 %v172
      %213 = vmatprep.subr.mxu0 0.0
      %214 = vmatpush1.msra.mxu0 %v171
      %215 = vmatprep.subr.mxu0 0.0
      %216 = vmatpush2.msra.mxu0 0.0
      %217 = vmatprep.subr.mxu0 0.0
      %218 = vmatpush2.msra.mxu0 0.0
      %219 = vmatprep.subr.mxu0 0.0
      %220 = vmatpush2.msra.mxu0 0.0
      %221 = vmatprep.subr.mxu0 0.0
      %222 = vmatpush2.msra.mxu0 0.0
      %223 = vmatprep.subr.mxu0 0.0
      %224 = vmatpush2.msra.mxu0 0.0
      %225 = vmatprep.subr.mxu0 0.0
      %226 = vmatpush2.msra.mxu0 0.0
      %227 = vmatprep.subr.mxu0 0.0
      %228 = vmatpush2.msra.mxu0 0.0
      %229 = vmatprep.subr.mxu0 0.0
      %230 = vmatpush2.msra.mxu0 0.0
      %231 = vmatprep.subr.mxu0 0.0
      %232 = vmatpush2.msra.mxu0 0.0
      %233 = vmatprep.subr.mxu0 0.0
      %234 = vmatpush2.msra.mxu0 0.0
      %235 = vmatprep.subr.mxu0 0.0
      %236 = vmatpush2.msra.mxu0 0.0
      %237 = vmatprep.subr.mxu0 0.0
      %238 = vmatpush2.msra.mxu0 0.0
      %239 = vmatprep.subr.mxu0 0.0
      %240 = vmatpush2.msra.mxu0 0.0
      %241 = vmatprep.subr.mxu0 0.0
      %242 = vmatpush2.msra.mxu0 0.0
      %243 = vmatprep.subr.mxu0 0.0
      %244 = vmatpush2.msra.mxu0 0.0
      %245 = vmatprep.subr.mxu0 0.0
      %246 = vmatpush2.msra.mxu0 0.0
      %247 = vmatprep.mubr.f32.mxu0 0.0
      %248 = vmatmul.mubr.f32.gmra.mxu0 %v177
      %v249 = vpop.f32.mrf.mxu0
      %v250 = vadd.f32 0.0, %v249
      %v251 = vpop.f32.mrf.mxu0
      %252 = vdwg.mxu0
      %253 = vst.msk [vmem:[%s141] sm:$0x7] %vm148, %v250
      %p254 = scmp.lt.s32.totalorder %s13, 1
      %s255 = scalar_select %p254, %s13, 1
      %s256 = smul.addr %s255, 4
      %s257 = scalar_lea.vmem %s2, %s256
      // Predicated region
      $region29: #{tpu_custom_call.1} parent=27 // pred_check
        %p258 = pneg %p78
      $region30: #{tpu_custom_call.1} parent=27 // pred_check_branch
        %260 = sbr.rel (%p258) target = $region32
      $region31: #{tpu_custom_call.1} parent=27 // pred_region
        _
      $region32: #{tpu_custom_call.1} parent=27 // pred_fallthru
        _
    $region28: #{tpu_custom_call.1} parent=5 // pred_fallthru
      _
    %p261 = scmp.le.s32.totalorder 2, %s8
    // Predicated region
    $region33: #{tpu_custom_call.1} parent=5 // pred_check
      %p262 = pneg %p261
    $region34: #{tpu_custom_call.1} parent=5 // pred_check_branch
      %264 = sbr.rel (%p262) target = $region36
    $region35: #{tpu_custom_call.1} parent=5 // pred_region
      %s265 = ssub.s32 %s8, 2
      // Predicated region
      $region37: #{tpu_custom_call.1} parent=35 // pred_check
        %p266 = pneg %p84
      $region38: #{tpu_custom_call.1} parent=35 // pred_check_branch
        %268 = sbr.rel (%p266) target = $region40
      $region39: #{tpu_custom_call.1} parent=35 // pred_region
        %p269 = scmp.lt.s32.totalorder %s14, 1
        %s270 = scalar_select %p269, %s14, 1
        %s271 = smul.addr %s270, 4
        %s272 = scalar_lea.vmem %s2, %s271
      $region40: #{tpu_custom_call.1} parent=35 // pred_fallthru
        _
    $region36: #{tpu_custom_call.1} parent=5 // pred_fallthru
      _
  $region6: #{tpu_custom_call.1} parent=0 // loop_footer
    %s12 = sadd.s32 1, %s8
  $region7: #{tpu_custom_call.1} parent=0 // loop_footer_branch
    %7 = sbr.rel target = $region3
  $region8: #{tpu_custom_call.1} parent=0 // loop_exit
    _

</llo_original>
